<compile_context>
chip_gen: v7x
topology: tpu7x:2x2x1
jax: 0.10.0
libtpu: 0.0.40
codegen_flags: <defaults>
</compile_context>

<pallas_src>
import functools

import jax
import jax.numpy as jnp
import numpy as np
from jax.experimental import pallas as pl
from jax.experimental.pallas import tpu as pltpu


def _round_up(v, m):
    return ((v + m - 1) // m) * m


def _matmul_bn_relu_kernel(a_ref, w_ref, scale_ref, bias_ref, o_ref, acc_ref):
    # a_ref:     (tm, tk)      bf16 im2col patch tile
    # w_ref:     (tk, tcout)   bf16 flattened conv-weight tile
    # scale_ref: (1, tcout)    f32 gamma / sqrt(var + eps)
    # bias_ref:  (1, tcout)    f32 beta - mean * scale
    # o_ref:     (tm, tcout)   f32 output tile
    # acc_ref:   (tm, tcout)   f32 accumulator (persists over the K axis)
    k = pl.program_id(2)

    @pl.when(k == 0)
    def _():
        acc_ref[...] = jnp.zeros_like(acc_ref)

    acc_ref[...] += jnp.dot(a_ref[...], w_ref[...],
                            preferred_element_type=jnp.float32)

    @pl.when(k == pl.num_programs(2) - 1)
    def _():
        y = acc_ref[...] * scale_ref[...] + bias_ref[...]
        o_ref[...] = jnp.maximum(y, 0.0).astype(o_ref.dtype)


@functools.partial(jax.jit, static_argnames=("kernel_size", "stride", "eps"))
def conv_bn_act_forward(x, weight, gamma, beta, running_mean, running_var,
                        *, kernel_size, stride=1, eps=1e-5):
    """Forward pass of conv_bn_act (eval-mode BN), NCHW in / NCHW out."""
    N, C, H, W = x.shape
    out_ch = weight.shape[0]
    p = (kernel_size - 1) // 2          # matches nn.Conv2d(padding=(k-1)//2)
    H_out = (H + 2 * p - kernel_size) // stride + 1
    W_out = (W + 2 * p - kernel_size) // stride + 1
    K = C * kernel_size * kernel_size
    M = N * H_out * W_out

    # ---- im2col, NHWC-native (no 6-D transpose of the 9x data) ----------
    x_nhwc = jnp.transpose(x, (0, 2, 3, 1)).astype(jnp.bfloat16)
    xp = jnp.pad(x_nhwc, ((0, 0), (p, p), (p, p), (0, 0)))
    taps = []
    for i in range(kernel_size):
        for j in range(kernel_size):
            taps.append(xp[:, i:i + stride * H_out:stride,
                           j:j + stride * W_out:stride, :])
    # Last axis ordered (kh, kw, Cin), channel minor.
    A = jnp.concatenate(taps, axis=-1).reshape(M, K)

    # PyTorch weight (Cout, Cin, kh, kw) -> (kh, kw, Cin, Cout) -> (K, Cout),
    # K ordering matches the tap concat above.
    B = jnp.transpose(weight, (2, 3, 1, 0)).reshape(K, out_ch)
    B = B.astype(jnp.bfloat16)

    # Fold eval-mode BN into per-channel scale/bias (f32).
    scale = (gamma / jnp.sqrt(running_var + eps)).astype(jnp.float32)
    bias = (beta - running_mean * scale).astype(jnp.float32)

    # ---- tiling / padding ------------------------------------------------
    tm = 512 if M >= 2048 else 256
    M_pad = _round_up(M, tm)

    cout_pad = _round_up(out_ch, 128)
    tcout = 256 if cout_pad % 256 == 0 else 128

    if K <= 512:
        K_pad, tk = K, K                 # single reduction step, no K padding
    else:
        K_pad = _round_up(K, 128)
        tk = 512 if K_pad % 512 == 0 else (256 if K_pad % 256 == 0 else 128)

    A = jnp.pad(A, ((0, M_pad - M), (0, K_pad - K)))
    B = jnp.pad(B, ((0, K_pad - K), (0, cout_pad - out_ch)))
    scale = jnp.pad(scale, (0, cout_pad - out_ch)).reshape(1, cout_pad)
    bias = jnp.pad(bias, (0, cout_pad - out_ch)).reshape(1, cout_pad)

    grid = (M_pad // tm, cout_pad // tcout, K_pad // tk)

    # VMEM budget: double-buffered bf16 A/B tiles, double-buffered f32 output
    # tile, f32 accumulator, scale/bias, plus slack.  Capped v7x-safe.
    vmem_bytes = (2 * tm * tk * 2 + 2 * tk * tcout * 2
                  + 2 * tm * tcout * 4 + tm * tcout * 4
                  + 4 * cout_pad * 4) + (1 << 20)
    vmem_limit = int(min(max(2 * vmem_bytes, 32 * 2**20), 48 * 2**20))

    out = pl.pallas_call(
        _matmul_bn_relu_kernel,
        out_shape=jax.ShapeDtypeStruct((M_pad, cout_pad), jnp.float32),
        grid=grid,
        in_specs=[
            pl.BlockSpec((tm, tk), lambda i, j, k: (i, k)),
            pl.BlockSpec((tk, tcout), lambda i, j, k: (k, j)),
            pl.BlockSpec((1, tcout), lambda i, j, k: (0, j)),
            pl.BlockSpec((1, tcout), lambda i, j, k: (0, j)),
        ],
        out_specs=pl.BlockSpec((tm, tcout), lambda i, j, k: (i, j)),
        scratch_shapes=[pltpu.VMEM((tm, tcout), jnp.float32)],
        compiler_params=pltpu.CompilerParams(
            dimension_semantics=("parallel", "parallel", "arbitrary"),
            vmem_limit_bytes=vmem_limit),
    )(A, B, scale, bias)

    # Un-pad first, then reshape/transpose only the small slab back to NCHW.
    out = out[:M, :out_ch].reshape(N, H_out, W_out, out_ch)
    # TODO(synk): emitting NHWC directly (or fusing the transpose into the
    #             consumer) would save one more HBM pass over the output.
    return jnp.transpose(out, (0, 3, 1, 2))


def _reference(x, weight, gamma, beta, running_mean, running_var,
               *, kernel_size, stride=1, eps=1e-5):
    p = (kernel_size - 1) // 2
    y = jax.lax.conv_general_dilated(
        x.astype(jnp.float32), weight.astype(jnp.float32),
        window_strides=(stride, stride), padding=[(p, p), (p, p)],
        dimension_numbers=("NCHW", "OIHW", "NCHW"))
    scale = gamma / jnp.sqrt(running_var + eps)
    bias = beta - running_mean * scale
    y = y * scale[None, :, None, None] + bias[None, :, None, None]
    return jnp.maximum(y, 0.0)


if __name__ == "__main__":
    # Small shapes consistent with conv_bn_act(kernel_size=3, in_ch=4, out_ch=8)
    kernel_size = 3
    in_ch, out_ch = 4, 8
    N, H, W = 2, 16, 16

    key = jax.random.PRNGKey(0)
    kx, kw, kg, kb, km, kv = jax.random.split(key, 6)

    x = jax.random.normal(kx, (N, in_ch, H, W), dtype=jnp.float32)
    weight = jax.random.normal(
        kw, (out_ch, in_ch, kernel_size, kernel_size), dtype=jnp.float32) * 0.1
    gamma = 1.0 + 0.1 * jax.random.normal(kg, (out_ch,), dtype=jnp.float32)
    beta = 0.1 * jax.random.normal(kb, (out_ch,), dtype=jnp.float32)
    running_mean = 0.05 * jax.random.normal(km, (out_ch,), dtype=jnp.float32)
    running_var = jnp.abs(1.0 + 0.1 * jax.random.normal(kv, (out_ch,),
                                                        dtype=jnp.float32))

    out = conv_bn_act_forward(
        x, weight, gamma, beta, running_mean, running_var,
        kernel_size=kernel_size, stride=1)
    out = jax.block_until_ready(out)

    ref = _reference(
        x, weight, gamma, beta, running_mean, running_var,
        kernel_size=kernel_size, stride=1)
    ref = jax.block_until_ready(ref)

    assert out.shape == (N, out_ch, H, W), out.shape
    # bf16 matmul operands with f32 accumulation -> relaxed tolerance vs f32 ref.
    np.testing.assert_allclose(np.asarray(out), np.asarray(ref),
                               rtol=2e-2, atol=2e-2)
    print("KERNEL_OK")
</pallas_src>

<mosaic_0001>
module attributes {stable_mosaic.version = 11 : i64} {
  func.func @_matmul_bn_relu_kernel(%arg0: i32, %arg1: i32, %arg2: i32, %arg3: memref<256x36xbf16, #tpu.memory_space<vmem>>, %arg4: memref<36x128xbf16, #tpu.memory_space<vmem>>, %arg5: memref<1x128xf32, #tpu.memory_space<vmem>>, %arg6: memref<1x128xf32, #tpu.memory_space<vmem>>, %arg7: memref<256x128xf32, #tpu.memory_space<vmem>>, %arg8: memref<256x128xf32, #tpu.memory_space<vmem>>) attributes {dimension_semantics = [#tpu.dimension_semantics<parallel>, #tpu.dimension_semantics<parallel>, #tpu.dimension_semantics<arbitrary>], iteration_bounds = array<i64: 2, 1, 1>, scalar_prefetch = 0 : i64, scratch_operands = 1 : i64, tpu.core_type = #tpu.core_type<tc>, window_params = [{transform_indices = @transform_0, window_bounds = array<i64: 256, 36>}, {transform_indices = @transform_1, window_bounds = array<i64: 36, 128>}, {transform_indices = @transform_2, window_bounds = array<i64: 1, 128>}, {transform_indices = @transform_3, window_bounds = array<i64: 1, 128>}, {transform_indices = @transform_4, window_bounds = array<i64: 256, 128>}]} {
    %c0_i32 = arith.constant 0 : i32
    %0 = arith.cmpi eq, %arg2, %c0_i32 : i32
    %1 = arith.extui %0 : i1 to i32
    %c0_i32_0 = arith.constant 0 : i32
    %2 = arith.cmpi ne, %1, %c0_i32_0 : i32
    scf.if %2 {
      %cst_10 = arith.constant 0.000000e+00 : f32
      %12 = vector.broadcast %cst_10 : f32 to vector<256x128xf32>
      %c0_11 = arith.constant 0 : index
      %c0_12 = arith.constant 0 : index
      %13 = vector.load %arg8[%c0_11, %c0_12] : memref<256x128xf32, #tpu.memory_space<vmem>>, vector<256x128xf32>
      tpu.vector_store %arg8[%c0_11, %c0_12], %12 {strides = array<i32>} : memref<256x128xf32, #tpu.memory_space<vmem>>, vector<256x128xf32>,
    } else {
    }
    %c0 = arith.constant 0 : index
    %c0_1 = arith.constant 0 : index
    %3 = vector.load %arg8[%c0, %c0_1] : memref<256x128xf32, #tpu.memory_space<vmem>>, vector<256x128xf32>
    %c0_2 = arith.constant 0 : index
    %c0_3 = arith.constant 0 : index
    %4 = vector.load %arg3[%c0_2, %c0_3] : memref<256x36xbf16, #tpu.memory_space<vmem>>, vector<256x36xbf16>
    %c0_4 = arith.constant 0 : index
    %c0_5 = arith.constant 0 : index
    %5 = vector.load %arg4[%c0_4, %c0_5] : memref<36x128xbf16, #tpu.memory_space<vmem>>, vector<36x128xbf16>
    %cst = arith.constant dense<0.000000e+00> : vector<256x128xf32>
    %6 = tpu.matmul %4, %5, %cst {dimension_numbers = #tpu.dot_dimension_numbers<[1], [0], [0], [1], [0, 0, 1, 1], [], []>} : vector<256x36xbf16>, vector<36x128xbf16>, vector<256x128xf32> -> vector<256x128xf32>
    %7 = arith.addf %3, %6 : vector<256x128xf32>
    %c0_6 = arith.constant 0 : index
    %c0_7 = arith.constant 0 : index
    %8 = vector.load %arg8[%c0_6, %c0_7] : memref<256x128xf32, #tpu.memory_space<vmem>>, vector<256x128xf32>
    tpu.vector_store %arg8[%c0_6, %c0_7], %7 {strides = array<i32>} : memref<256x128xf32, #tpu.memory_space<vmem>>, vector<256x128xf32>,
    %c0_i32_8 = arith.constant 0 : i32
    %9 = arith.cmpi eq, %arg2, %c0_i32_8 : i32
    %10 = arith.extui %9 : i1 to i32
    %c0_i32_9 = arith.constant 0 : i32
    %11 = arith.cmpi ne, %10, %c0_i32_9 : i32
    scf.if %11 {
      %c0_10 = arith.constant 0 : index
      %c0_11 = arith.constant 0 : index
      %12 = vector.load %arg8[%c0_10, %c0_11] : memref<256x128xf32, #tpu.memory_space<vmem>>, vector<256x128xf32>
      %c0_12 = arith.constant 0 : index
      %c0_13 = arith.constant 0 : index
      %13 = vector.load %arg5[%c0_12, %c0_13] : memref<1x128xf32, #tpu.memory_space<vmem>>, vector<1x128xf32>
      %14 = vector.broadcast %13 : vector<1x128xf32> to vector<256x128xf32>
      %15 = arith.mulf %12, %14 : vector<256x128xf32>
      %c0_14 = arith.constant 0 : index
      %c0_15 = arith.constant 0 : index
      %16 = vector.load %arg6[%c0_14, %c0_15] : memref<1x128xf32, #tpu.memory_space<vmem>>, vector<1x128xf32>
      %17 = vector.broadcast %16 : vector<1x128xf32> to vector<256x128xf32>
      %18 = arith.addf %15, %17 : vector<256x128xf32>
      %cst_16 = arith.constant 0.000000e+00 : f32
      %19 = vector.broadcast %cst_16 : f32 to vector<256x128xf32>
      %20 = arith.maximumf %18, %19 : vector<256x128xf32>
      %c0_17 = arith.constant 0 : index
      %c0_18 = arith.constant 0 : index
      %21 = vector.load %arg7[%c0_17, %c0_18] : memref<256x128xf32, #tpu.memory_space<vmem>>, vector<256x128xf32>
      tpu.vector_store %arg7[%c0_17, %c0_18], %20 {strides = array<i32>} : memref<256x128xf32, #tpu.memory_space<vmem>>, vector<256x128xf32>,
    } else {
    }
    return
  }
  func.func @transform_0(%arg0: i32, %arg1: i32, %arg2: i32) -> (i32, i32) {
    %c0_i32 = arith.constant 0 : i32
    return %arg0, %arg2 : i32, i32
  }
  func.func @transform_1(%arg0: i32, %arg1: i32, %arg2: i32) -> (i32, i32) {
    %c0_i32 = arith.constant 0 : i32
    return %arg2, %arg1 : i32, i32
  }
  func.func @transform_2(%arg0: i32, %arg1: i32, %arg2: i32) -> (i32, i32) {
    %c0_i32 = arith.constant 0 : i32
    %c0_i32_0 = arith.constant 0 : i32
    return %c0_i32, %arg1 : i32, i32
  }
  func.func @transform_3(%arg0: i32, %arg1: i32, %arg2: i32) -> (i32, i32) {
    %c0_i32 = arith.constant 0 : i32
    %c0_i32_0 = arith.constant 0 : i32
    return %c0_i32, %arg1 : i32, i32
  }
  func.func @transform_4(%arg0: i32, %arg1: i32, %arg2: i32) -> (i32, i32) {
    %c0_i32 = arith.constant 0 : i32
    return %arg0, %arg1 : i32, i32
  }
}

</mosaic_0001>

<llo_original>
// kernel: conv_bn_act_forward.1
$region0: #{conv_bn_act_forward.1}
  #allocation0 [shape = 'u32[]', space=smem, size = 0x4, offset = 0x4, fixed_abs, tag = 'smem constant byte address 0x4 - core index']
  #allocation1 [shape = 'u32[144,128]{1,0:T(1,128)}', space=vmem, size = 0x12000, scoped, tag = 'internal scratch']
  #allocation2 [shape = 'f32[256,128]{1,0:T(8,128)}', space=vmem, size = 0x20000, scoped, tag = 'scratch operand']
  %s0 = inlined_call_operand.vmem [shape: bf16[512,36], index: 0, kind: input, shape index: {}]
  %s1 = inlined_call_operand.vmem [shape: bf16[36,128], index: 1, kind: input, shape index: {}]
  %s2 = inlined_call_operand.vmem [shape: f32[1,128], index: 2, kind: input, shape index: {}]
  %s3 = inlined_call_operand.vmem [shape: f32[1,128], index: 3, kind: input, shape index: {}]
  %s4 = inlined_call_operand.vmem [shape: f32[512,128], index: 4, kind: output, shape index: {}]
  %s5 = sld [smem:[#allocation0]]
  $region57: #{conv_bn_act_forward.1} parent=0
    _
  %s7 = ssub.s32 1, %s5
  %s8 = scalar_select 0, %s7, %s5
  loop: start=0, step=1, limit=4
  $region2: #{conv_bn_act_forward.1} parent=0 // loop_pre_header
    _
  $region3: #{conv_bn_act_forward.1} parent=0 // loop_header
    %s10 = sphi 0, %s14
    %p11 = scmp.ge.s32.totalorder %s10, 4
    %s17 = sphi 0, %s36
    %s18 = sphi 0, %s32
    %s19 = sphi 0, %s28
    %s20 = sphi 0, %s17
    %s21 = sphi 0, %s18
    %s22 = sphi 0, %s19
    %s23 = sphi 0, %s20
    %s24 = sphi 0, %s21
    %s25 = sphi 0, %s22
    %s41 = sphi 0, %s43
    %s44 = sphi 0, %s41
    %s45 = sphi 0, %s44
    %s61 = sphi 0, %s45
    %s69 = sphi 0, %s71
    %s72 = sphi 0, %s69
    %s73 = sphi 0, %s72
    %s89 = sphi 0, %s73
    %s95 = sphi 0, %s97
    %s98 = sphi 0, %s95
    %s99 = sphi 0, %s98
    %s115 = sphi 0, %s99
    %s121 = sphi 0, %s123
    %s124 = sphi 0, %s121
    %s125 = sphi 0, %s124
    %s141 = sphi 0, %s125
    %s149 = sphi 0, %s151
    %s152 = sphi 0, %s149
    %s153 = sphi 0, %s152
    %s169 = sphi 0, %s153
  $region4: #{conv_bn_act_forward.1} parent=0 // loop_header_branch
    %13 = sbr.rel (%p11) target = $region8
  $region5: #{conv_bn_act_forward.1} parent=0 // loop_body
    %s15 = ssub.s32 %s10, 1
    %s16 = ssub.s32 %s10, 2
    %s26 = sadd.s32 1, %s19
    %p27 = scmp.ge.s32.totalorder %s26, 1
    %s28 = scalar_select %p27, 0, %s26
    %s29 = sadd.s32 1, %s18
    %s30 = scalar_select %p27, %s29, %s18
    %p31 = scmp.ge.s32.totalorder %s30, 1
    %s32 = scalar_select %p31, 0, %s30
    %s33 = sadd.s32 1, %s17
    %s34 = scalar_select %p31, %s33, %s17
    %p35 = scmp.ge.s32.totalorder %s34, 2
    %s36 = scalar_select %p35, 0, %s34
    %s37 = ssub.s32 %s17, %s36
    %s38 = ssub.s32 %s19, %s28
    %s39 = sor.u32 %s37, %s38
    %p40 = scmp.eq.s32.totalorder %s39, 0
    %s42 = sadd.s32 %s41, 1
    %s43 = scalar_select %p40, %s41, %s42
    %p46 = pneg %p40
    %p47 = scmp.eq.s32.totalorder %s10, 1
    %p48 = por %p46, %p47
    %p49 = scmp.ne.s32.totalorder %s41, %s44
    %p50 = scmp.eq.s32.totalorder %s10, 0
    %p51 = por %p49, %p50
    %p52 = scmp.ne.s32.totalorder %s41, %s44
    %p53 = scmp.eq.s32.totalorder %s15, 1
    %p54 = por %p52, %p53
    %p55 = scmp.ne.s32.totalorder %s44, %s45
    %p56 = scmp.eq.s32.totalorder %s15, 0
    %p57 = por %p55, %p56
    %p58 = scmp.ne.s32.totalorder %s44, %s45
    %p59 = scmp.eq.s32.totalorder %s16, 1
    %p60 = por %p58, %p59
    %p62 = scmp.ne.s32.totalorder %s45, %s61
    %p63 = scmp.eq.s32.totalorder %s16, 0
    %p64 = por %p62, %p63
    %s65 = ssub.s32 %s19, %s28
    %s66 = ssub.s32 %s18, %s32
    %s67 = sor.u32 %s65, %s66
    %p68 = scmp.eq.s32.totalorder %s67, 0
    %s70 = sadd.s32 %s69, 1
    %s71 = scalar_select %p68, %s69, %s70
    %p74 = pneg %p68
    %p75 = scmp.eq.s32.totalorder %s10, 1
    %p76 = por %p74, %p75
    %p77 = scmp.ne.s32.totalorder %s69, %s72
    %p78 = scmp.eq.s32.totalorder %s10, 0
    %p79 = por %p77, %p78
    %p80 = scmp.ne.s32.totalorder %s69, %s72
    %p81 = scmp.eq.s32.totalorder %s15, 1
    %p82 = por %p80, %p81
    %p83 = scmp.ne.s32.totalorder %s72, %s73
    %p84 = scmp.eq.s32.totalorder %s15, 0
    %p85 = por %p83, %p84
    %p86 = scmp.ne.s32.totalorder %s72, %s73
    %p87 = scmp.eq.s32.totalorder %s16, 1
    %p88 = por %p86, %p87
    %p90 = scmp.ne.s32.totalorder %s73, %s89
    %p91 = scmp.eq.s32.totalorder %s16, 0
    %p92 = por %p90, %p91
    %s93 = ssub.s32 %s18, %s32
    %p94 = scmp.eq.s32.totalorder %s93, 0
    %s96 = sadd.s32 %s95, 1
    %s97 = scalar_select %p94, %s95, %s96
    %p100 = pneg %p94
    %p101 = scmp.eq.s32.totalorder %s10, 1
    %p102 = por %p100, %p101
    %p103 = scmp.ne.s32.totalorder %s95, %s98
    %p104 = scmp.eq.s32.totalorder %s10, 0
    %p105 = por %p103, %p104
    %p106 = scmp.ne.s32.totalorder %s95, %s98
    %p107 = scmp.eq.s32.totalorder %s15, 1
    %p108 = por %p106, %p107
    %p109 = scmp.ne.s32.totalorder %s98, %s99
    %p110 = scmp.eq.s32.totalorder %s15, 0
    %p111 = por %p109, %p110
    %p112 = scmp.ne.s32.totalorder %s98, %s99
    %p113 = scmp.eq.s32.totalorder %s16, 1
    %p114 = por %p112, %p113
    %p116 = scmp.ne.s32.totalorder %s99, %s115
    %p117 = scmp.eq.s32.totalorder %s16, 0
    %p118 = por %p116, %p117
    %s119 = ssub.s32 %s18, %s32
    %p120 = scmp.eq.s32.totalorder %s119, 0
    %s122 = sadd.s32 %s121, 1
    %s123 = scalar_select %p120, %s121, %s122
    %p126 = pneg %p120
    %p127 = scmp.eq.s32.totalorder %s10, 1
    %p128 = por %p126, %p127
    %p129 = scmp.ne.s32.totalorder %s121, %s124
    %p130 = scmp.eq.s32.totalorder %s10, 0
    %p131 = por %p129, %p130
    %p132 = scmp.ne.s32.totalorder %s121, %s124
    %p133 = scmp.eq.s32.totalorder %s15, 1
    %p134 = por %p132, %p133
    %p135 = scmp.ne.s32.totalorder %s124, %s125
    %p136 = scmp.eq.s32.totalorder %s15, 0
    %p137 = por %p135, %p136
    %p138 = scmp.ne.s32.totalorder %s124, %s125
    %p139 = scmp.eq.s32.totalorder %s16, 1
    %p140 = por %p138, %p139
    %p142 = scmp.ne.s32.totalorder %s125, %s141
    %p143 = scmp.eq.s32.totalorder %s16, 0
    %p144 = por %p142, %p143
    %s145 = ssub.s32 %s17, %s36
    %s146 = ssub.s32 %s18, %s32
    %s147 = sor.u32 %s145, %s146
    %p148 = scmp.eq.s32.totalorder %s147, 0
    %s150 = sadd.s32 %s149, 1
    %s151 = scalar_select %p148, %s149, %s150
    %p154 = pneg %p148
    %p155 = scmp.eq.s32.totalorder %s10, 1
    %p156 = por %p154, %p155
    %p157 = scmp.ne.s32.totalorder %s149, %s152
    %p158 = scmp.eq.s32.totalorder %s10, 0
    %p159 = por %p157, %p158
    %p160 = scmp.ne.s32.totalorder %s149, %s152
    %p161 = scmp.eq.s32.totalorder %s15, 1
    %p162 = por %p160, %p161
    %p163 = scmp.ne.s32.totalorder %s152, %s153
    %p164 = scmp.eq.s32.totalorder %s15, 0
    %p165 = por %p163, %p164
    %p166 = scmp.ne.s32.totalorder %s152, %s153
    %p167 = scmp.eq.s32.totalorder %s16, 1
    %p168 = por %p166, %p167
    %p170 = scmp.ne.s32.totalorder %s153, %s169
    %p171 = scmp.eq.s32.totalorder %s16, 0
    %p172 = por %p170, %p171
    %p173 = scmp.le.s32.totalorder 1, %s10
    %p174 = scmp.lt.s32.totalorder %s10, 3
    %p175 = pnand %p173, %p174
    %p176 = pneg %p175
    // Predicated region
    $region9: #{conv_bn_act_forward.1} parent=5 // pred_check
      _
    $region10: #{conv_bn_act_forward.1} parent=5 // pred_check_branch
      %178 = sbr.rel (%p175) target = $region12
    $region11: #{conv_bn_act_forward.1} parent=5 // pred_region
      %s179 = ssub.s32 %s10, 1
      // Predicated region
      $region13: #{conv_bn_act_forward.1} parent=11 // pred_check
        %p180 = pneg %p85
      $region14: #{conv_bn_act_forward.1} parent=11 // pred_check_branch
        %182 = sbr.rel (%p180) target = $region16
      $region15: #{conv_bn_act_forward.1} parent=11 // pred_region
        %s183 = smul.u32 5, %s22
        %p184 = scmp.lt.s32.totalorder %s183, 4
        %s185 = scalar_select %p184, %s183, 4
        %p186 = scmp.lt.s32.totalorder %s21, 0
        %s187 = scalar_select %p186, %s21, 0
        %s188 = sadd.s32 %s187, %s185
        %s189 = smul.addr %s188, 4
        %s190 = scalar_lea.vmem %s1, %s189
        %s191 = smul.u32 5, %s22
      $region16: #{conv_bn_act_forward.1} parent=11 // pred_fallthru
        _
      // Predicated region
      $region17: #{conv_bn_act_forward.1} parent=11 // pred_check
        %p192 = pneg %p111
      $region18: #{conv_bn_act_forward.1} parent=11 // pred_check_branch
        %194 = sbr.rel (%p192) target = $region20
      $region19: #{conv_bn_act_forward.1} parent=11 // pred_region
        %p195 = scmp.lt.s32.totalorder %s21, 0
        %s196 = scalar_select %p195, %s21, 0
        %s197 = scalar_lea.vmem %s2, %s196
      $region20: #{conv_bn_act_forward.1} parent=11 // pred_fallthru
        _
      // Predicated region
      $region21: #{conv_bn_act_forward.1} parent=11 // pred_check
        %p198 = pneg %p137
      $region22: #{conv_bn_act_forward.1} parent=11 // pred_check_branch
        %200 = sbr.rel (%p198) target = $region24
      $region23: #{conv_bn_act_forward.1} parent=11 // pred_region
        %p201 = scmp.lt.s32.totalorder %s21, 0
        %s202 = scalar_select %p201, %s21, 0
        %s203 = scalar_lea.vmem %s3, %s202
      $region24: #{conv_bn_act_forward.1} parent=11 // pred_fallthru
        _
    $region12: #{conv_bn_act_forward.1} parent=5 // pred_fallthru
      _
    %p204 = scmp.lt.s32.totalorder %s10, 2
    // Predicated region
    $region25: #{conv_bn_act_forward.1} parent=5 // pred_check
      %p205 = pneg %p204
    $region26: #{conv_bn_act_forward.1} parent=5 // pred_check_branch
      %207 = sbr.rel (%p205) target = $region28
    $region27: #{conv_bn_act_forward.1} parent=5 // pred_region
      // Predicated region
      $region29: #{conv_bn_act_forward.1} parent=27 // pred_check
        %p208 = pneg %p51
      $region30: #{conv_bn_act_forward.1} parent=27 // pred_check_branch
        %210 = sbr.rel (%p208) target = $region32
      $region31: #{conv_bn_act_forward.1} parent=27 // pred_region
        %s211 = smul.u32 32, %s17
        %p212 = scmp.lt.s32.totalorder %s211, 63
        %s213 = scalar_select %p212, %s211, 63
        %p214 = scmp.lt.s32.totalorder %s19, 0
        %s215 = scalar_select %p214, %s19, 0
        %s216 = sadd.s32 %s215, %s213
        %s217 = smul.addr %s216, 4
        %s218 = scalar_lea.vmem %s0, %s217
        %s219 = smul.u32 32, %s17
      $region32: #{conv_bn_act_forward.1} parent=27 // pred_fallthru
        _
    $region28: #{conv_bn_act_forward.1} parent=5 // pred_fallthru
      _
    %p220 = scmp.le.s32.totalorder 1, %s10
    %p221 = scmp.lt.s32.totalorder %s10, 3
    %p222 = pnand %p220, %p221
    %p223 = pneg %p222
    // Predicated region
    $region33: #{conv_bn_act_forward.1} parent=5 // pred_check
      _
    $region34: #{conv_bn_act_forward.1} parent=5 // pred_check_branch
      %225 = sbr.rel (%p222) target = $region36
    $region35: #{conv_bn_act_forward.1} parent=5 // pred_region
      %s226 = ssub.s32 %s10, 1
      %s227 = smul.u32 32, %s20
      %p228 = scmp.lt.s32.totalorder %s227, 63
      %s229 = scalar_select %p228, %s227, 63
      %p230 = scmp.lt.s32.totalorder %s22, 0
      %s231 = scalar_select %p230, %s22, 0
      %s232 = sadd.s32 %s231, %s229
      %s233 = smul.addr %s232, 4
      %s234 = scalar_lea.vmem %s0, %s233
      %p235 = pneg %p57
      %p236 = pneg %p54
      %s237 = smul.u32 5, %s22
      %p238 = scmp.lt.s32.totalorder %s237, 4
      %s239 = scalar_select %p238, %s237, 4
      %p240 = scmp.lt.s32.totalorder %s21, 0
      %s241 = scalar_select %p240, %s21, 0
      %s242 = sadd.s32 %s241, %s239
      %s243 = smul.addr %s242, 4
      %s244 = scalar_lea.vmem %s1, %s243
      %p245 = pneg %p85
      %p246 = pneg %p82
      %p247 = scmp.lt.s32.totalorder %s21, 0
      %s248 = scalar_select %p247, %s21, 0
      %s249 = scalar_lea.vmem %s2, %s248
      %p250 = pneg %p111
      %p251 = pneg %p108
      %p252 = scmp.lt.s32.totalorder %s21, 0
      %s253 = scalar_select %p252, %s21, 0
      %s254 = scalar_lea.vmem %s3, %s253
      %p255 = pneg %p137
      %p256 = pneg %p134
      %p257 = pneg %p165
      %p258 = pneg %p162
      %s259 = smul.u32 32, %s20
      %p260 = scmp.lt.s32.totalorder %s259, 63
      %s261 = scalar_select %p260, %s259, 63
      %p262 = scmp.lt.s32.totalorder %s21, 0
      %s263 = scalar_select %p262, %s21, 0
      %s264 = sadd.s32 %s263, %s261
      %s265 = smul.addr %s264, 8
      %s266 = scalar_lea.vmem %s4, %s265
      %s267 = smul.u32 32, %s20
      %p268 = scmp.lt.s32.totalorder %s267, 63
      %s269 = scalar_select %p268, %s267, 63
      %p270 = scmp.lt.s32.totalorder %s22, 0
      %s271 = scalar_select %p270, %s22, 0
      %s272 = sadd.s32 %s271, %s269
      %s273 = smul.addr %s272, 4
      %s274 = scalar_lea.vmem %s0, %s273
      %s275 = smul.u32 32, %s20
      %s276 = smul.u32 5, %s22
      %p277 = scmp.lt.s32.totalorder %s276, 4
      %s278 = scalar_select %p277, %s276, 4
      %p279 = scmp.lt.s32.totalorder %s21, 0
      %s280 = scalar_select %p279, %s21, 0
      %s281 = sadd.s32 %s280, %s278
      %s282 = smul.addr %s281, 4
      %s283 = scalar_lea.vmem %s1, %s282
      %s284 = smul.u32 5, %s22
      %p285 = scmp.lt.s32.totalorder %s21, 0
      %s286 = scalar_select %p285, %s21, 0
      %s287 = scalar_lea.vmem %s2, %s286
      %p288 = scmp.lt.s32.totalorder %s21, 0
      %s289 = scalar_select %p288, %s21, 0
      %s290 = scalar_lea.vmem %s3, %s289
      %s291 = smul.u32 32, %s20
      %p292 = scmp.lt.s32.totalorder %s291, 63
      %s293 = scalar_select %p292, %s291, 63
      %p294 = scmp.lt.s32.totalorder %s21, 0
      %s295 = scalar_select %p294, %s21, 0
      %s296 = sadd.s32 %s295, %s293
      %s297 = smul.addr %s296, 8
      %s298 = scalar_lea.vmem %s4, %s297
      %s299 = smul.u32 32, %s20
      %p301 = scmp.eq.s32.totalorder %s22, 0
      // Predicated region
      $region37: #{conv_bn_act_forward.1} parent=35 // pred_check
        %p302 = pneg %p301
      $region38: #{conv_bn_act_forward.1} parent=35 // pred_check_branch
        %304 = sbr.rel (%p302) target = $region40
      $region39: #{conv_bn_act_forward.1} parent=35 // pred_region
        %305 = vst [vmem:[#allocation2] sm:$0xff] 0.0
        %306 = vst [vmem:[#allocation2 + $0x8] sm:$0xff] 0.0
        %307 = vst [vmem:[#allocation2 + $0x10] sm:$0xff] 0.0
        %308 = vst [vmem:[#allocation2 + $0x18] sm:$0xff] 0.0
        %309 = vst [vmem:[#allocation2 + $0x20] sm:$0xff] 0.0
        %310 = vst [vmem:[#allocation2 + $0x28] sm:$0xff] 0.0
        %311 = vst [vmem:[#allocation2 + $0x30] sm:$0xff] 0.0
        %312 = vst [vmem:[#allocation2 + $0x38] sm:$0xff] 0.0
        %313 = vst [vmem:[#allocation2 + $0x40] sm:$0xff] 0.0
        %314 = vst [vmem:[#allocation2 + $0x48] sm:$0xff] 0.0
        %315 = vst [vmem:[#allocation2 + $0x50] sm:$0xff] 0.0
        %316 = vst [vmem:[#allocation2 + $0x58] sm:$0xff] 0.0
        %317 = vst [vmem:[#allocation2 + $0x60] sm:$0xff] 0.0
        %318 = vst [vmem:[#allocation2 + $0x68] sm:$0xff] 0.0
        %319 = vst [vmem:[#allocation2 + $0x70] sm:$0xff] 0.0
        %320 = vst [vmem:[#allocation2 + $0x78] sm:$0xff] 0.0
        %321 = vst [vmem:[#allocation2 + $0x80] sm:$0xff] 0.0
        %322 = vst [vmem:[#allocation2 + $0x88] sm:$0xff] 0.0
        %323 = vst [vmem:[#allocation2 + $0x90] sm:$0xff] 0.0
        %324 = vst [vmem:[#allocation2 + $0x98] sm:$0xff] 0.0
        %325 = vst [vmem:[#allocation2 + $0xa0] sm:$0xff] 0.0
        %326 = vst [vmem:[#allocation2 + $0xa8] sm:$0xff] 0.0
        %327 = vst [vmem:[#allocation2 + $0xb0] sm:$0xff] 0.0
        %328 = vst [vmem:[#allocation2 + $0xb8] sm:$0xff] 0.0
        %329 = vst [vmem:[#allocation2 + $0xc0] sm:$0xff] 0.0
        %330 = vst [vmem:[#allocation2 + $0xc8] sm:$0xff] 0.0
        %331 = vst [vmem:[#allocation2 + $0xd0] sm:$0xff] 0.0
        %332 = vst [vmem:[#allocation2 + $0xd8] sm:$0xff] 0.0
        %333 = vst [vmem:[#allocation2 + $0xe0] sm:$0xff] 0.0
        %334 = vst [vmem:[#allocation2 + $0xe8] sm:$0xff] 0.0
        %335 = vst [vmem:[#allocation2 + $0xf0] sm:$0xff] 0.0
        %336 = vst [vmem:[#allocation2 + $0xf8] sm:$0xff] 0.0
      $region40: #{conv_bn_act_forward.1} parent=35 // pred_fallthru
        _
      %v337 = vld [vmem:[#allocation2] sm:$0xff]
      %v338 = vld [vmem:[#allocation2 + $0x8] sm:$0xff]
      %v339 = vld [vmem:[#allocation2 + $0x10] sm:$0xff]
      %v340 = vld [vmem:[#allocation2 + $0x18] sm:$0xff]
      %v341 = vld [vmem:[#allocation2 + $0x20] sm:$0xff]
      %v342 = vld [vmem:[#allocation2 + $0x28] sm:$0xff]
      %v343 = vld [vmem:[#allocation2 + $0x30] sm:$0xff]
      %v344 = vld [vmem:[#allocation2 + $0x38] sm:$0xff]
      %v345 = vld [vmem:[#allocation2 + $0x40] sm:$0xff]
      %v346 = vld [vmem:[#allocation2 + $0x48] sm:$0xff]
      %v347 = vld [vmem:[#allocation2 + $0x50] sm:$0xff]
      %v348 = vld [vmem:[#allocation2 + $0x58] sm:$0xff]
      %v349 = vld [vmem:[#allocation2 + $0x60] sm:$0xff]
      %v350 = vld [vmem:[#allocation2 + $0x68] sm:$0xff]
      %v351 = vld [vmem:[#allocation2 + $0x70] sm:$0xff]
      %v352 = vld [vmem:[#allocation2 + $0x78] sm:$0xff]
      %v353 = vld [vmem:[#allocation2 + $0x80] sm:$0xff]
      %v354 = vld [vmem:[#allocation2 + $0x88] sm:$0xff]
      %v355 = vld [vmem:[#allocation2 + $0x90] sm:$0xff]
      %v356 = vld [vmem:[#allocation2 + $0x98] sm:$0xff]
      %v357 = vld [vmem:[#allocation2 + $0xa0] sm:$0xff]
      %v358 = vld [vmem:[#allocation2 + $0xa8] sm:$0xff]
      %v359 = vld [vmem:[#allocation2 + $0xb0] sm:$0xff]
      %v360 = vld [vmem:[#allocation2 + $0xb8] sm:$0xff]
      %v361 = vld [vmem:[#allocation2 + $0xc0] sm:$0xff]
      %v362 = vld [vmem:[#allocation2 + $0xc8] sm:$0xff]
      %v363 = vld [vmem:[#allocation2 + $0xd0] sm:$0xff]
      %v364 = vld [vmem:[#allocation2 + $0xd8] sm:$0xff]
      %v365 = vld [vmem:[#allocation2 + $0xe0] sm:$0xff]
      %v366 = vld [vmem:[#allocation2 + $0xe8] sm:$0xff]
      %v367 = vld [vmem:[#allocation2 + $0xf0] sm:$0xff]
      %v368 = vld [vmem:[#allocation2 + $0xf8] sm:$0xff]
      %v369 = vld [vmem:[%s274] sm:$0xf]
      %v370 = vld [vmem:[%s274 + $0x4] sm:$0xf]
      %v371 = vld [vmem:[%s274 + $0x8] sm:$0xf]
      %v372 = vld [vmem:[%s274 + $0xc] sm:$0xf]
      %v373 = vld [vmem:[%s274 + $0x10] sm:$0xf]
      %v374 = vld [vmem:[%s274 + $0x14] sm:$0xf]
      %v375 = vld [vmem:[%s274 + $0x18] sm:$0xf]
      %v376 = vld [vmem:[%s274 + $0x1c] sm:$0xf]
      %v377 = vld [vmem:[%s274 + $0x20] sm:$0xf]
      %v378 = vld [vmem:[%s274 + $0x24] sm:$0xf]
      %v379 = vld [vmem:[%s274 + $0x28] sm:$0xf]
      %v380 = vld [vmem:[%s274 + $0x2c] sm:$0xf]
      %v381 = vld [vmem:[%s274 + $0x30] sm:$0xf]
      %v382 = vld [vmem:[%s274 + $0x34] sm:$0xf]
      %v383 = vld [vmem:[%s274 + $0x38] sm:$0xf]
      %v384 = vld [vmem:[%s274 + $0x3c] sm:$0xf]
      %v385 = vld [vmem:[%s274 + $0x40] sm:$0xf]
      %v386 = vld [vmem:[%s274 + $0x44] sm:$0xf]
      %v387 = vld [vmem:[%s274 + $0x48] sm:$0xf]
      %v388 = vld [vmem:[%s274 + $0x4c] sm:$0xf]
      %v389 = vld [vmem:[%s274 + $0x50] sm:$0xf]
      %v390 = vld [vmem:[%s274 + $0x54] sm:$0xf]
      %v391 = vld [vmem:[%s274 + $0x58] sm:$0xf]
      %v392 = vld [vmem:[%s274 + $0x5c] sm:$0xf]
      %v393 = vld [vmem:[%s274 + $0x60] sm:$0xf]
      %v394 = vld [vmem:[%s274 + $0x64] sm:$0xf]
      %v395 = vld [vmem:[%s274 + $0x68] sm:$0xf]
      %v396 = vld [vmem:[%s274 + $0x6c] sm:$0xf]
      %v397 = vld [vmem:[%s274 + $0x70] sm:$0xf]
      %v398 = vld [vmem:[%s274 + $0x74] sm:$0xf]
      %v399 = vld [vmem:[%s274 + $0x78] sm:$0xf]
      %v400 = vld [vmem:[%s274 + $0x7c] sm:$0xf]
      %v401 = vld [vmem:[%s283] sm:$0xf]
      %v402 = vld [vmem:[%s283 + $0x4] sm:$0xf]
      %v403 = vld [vmem:[%s283 + $0x8] sm:$0xf]
      %v404 = vld [vmem:[%s283 + $0xc] sm:$0xf]
      %v405 = vld [vmem:[%s283 + $0x10] sm:$0x3]
      %v438 = vunpack.c.l.b16 %v369
      %v439 = vunpack.c.l.b16 %v370
      %v440 = vunpack.c.l.b16 %v371
      %v441 = vunpack.c.l.b16 %v372
      %v442 = vunpack.c.l.b16 %v373
      %v443 = vunpack.c.l.b16 %v374
      %v444 = vunpack.c.l.b16 %v375
      %v445 = vunpack.c.l.b16 %v376
      %v446 = vunpack.c.l.b16 %v377
      %v447 = vunpack.c.l.b16 %v378
      %v448 = vunpack.c.l.b16 %v379
      %v449 = vunpack.c.l.b16 %v380
      %v450 = vunpack.c.l.b16 %v381
      %v451 = vunpack.c.l.b16 %v382
      %v452 = vunpack.c.l.b16 %v383
      %v453 = vunpack.c.l.b16 %v384
      %v454 = vunpack.c.l.b16 %v385
      %v455 = vunpack.c.l.b16 %v386
      %v456 = vunpack.c.l.b16 %v387
      %v457 = vunpack.c.l.b16 %v388
      %v458 = vunpack.c.l.b16 %v389
      %v459 = vunpack.c.l.b16 %v390
      %v460 = vunpack.c.l.b16 %v391
      %v461 = vunpack.c.l.b16 %v392
      %v462 = vunpack.c.l.b16 %v393
      %v463 = vunpack.c.l.b16 %v394
      %v464 = vunpack.c.l.b16 %v395
      %v465 = vunpack.c.l.b16 %v396
      %v466 = vunpack.c.l.b16 %v397
      %v467 = vunpack.c.l.b16 %v398
      %v468 = vunpack.c.l.b16 %v399
      %v469 = vunpack.c.l.b16 %v400
      %v470 = vpack.c.b16 %v439, %v438
      %v471 = vpack.c.b16 %v441, %v440
      %v472 = vpack.c.b16 %v443, %v442
      %v473 = vpack.c.b16 %v445, %v444
      %v474 = vpack.c.b16 %v447, %v446
      %v475 = vpack.c.b16 %v449, %v448
      %v476 = vpack.c.b16 %v451, %v450
      %v477 = vpack.c.b16 %v453, %v452
      %v478 = vpack.c.b16 %v455, %v454
      %v479 = vpack.c.b16 %v457, %v456
      %v480 = vpack.c.b16 %v459, %v458
      %v481 = vpack.c.b16 %v461, %v460
      %v482 = vpack.c.b16 %v463, %v462
      %v483 = vpack.c.b16 %v465, %v464
      %v484 = vpack.c.b16 %v467, %v466
      %v485 = vpack.c.b16 %v469, %v468
      %v491 = vunpack.c.l.b16 %v401
      %v492 = vunpack.c.l.b16 %v402
      %v493 = vunpack.c.l.b16 %v403
      %v494 = vunpack.c.l.b16 %v404
      %v495 = vunpack.c.l.b16 %v405
      %v496 = vpack.c.b16 %v492, %v491
      %v497 = vpack.c.b16 %v494, %v493
      %v498 = vpack.c.b16 %v495, %v495
      %vm501 = vcmask 293888
      %v503 = vsel %vm501, %v470, 0
      %v506 = vsel %vm501, %v471, 0
      %v509 = vsel %vm501, %v472, 0
      %v512 = vsel %vm501, %v473, 0
      %v515 = vsel %vm501, %v474, 0
      %v518 = vsel %vm501, %v475, 0
      %v521 = vsel %vm501, %v476, 0
      %v524 = vsel %vm501, %v477, 0
      %v527 = vsel %vm501, %v478, 0
      %v530 = vsel %vm501, %v479, 0
      %v533 = vsel %vm501, %v480, 0
      %v536 = vsel %vm501, %v481, 0
      %v539 = vsel %vm501, %v482, 0
      %v542 = vsel %vm501, %v483, 0
      %v545 = vsel %vm501, %v484, 0
      %v548 = vsel %vm501, %v485, 0
      %vm550 = vcmask 1041408
      %v552 = vsel %vm550, %v498, 0
      %554 = vmatprep.subr.bf16.mxu0 0
      %555 = vmatpush1.bf16.msra.mxu0 %v496
      %556 = vmatprep.subr.bf16.mxu0 0
      %557 = vmatpush1.bf16.msra.mxu0 %v497
      %558 = vmatprep.subr.bf16.mxu0 0
      %559 = vmatpush1.bf16.msra.mxu0 %v552
      %560 = vmatprep.subr.bf16.mxu0 0
      %561 = vmatpush1.bf16.msra.mxu0 0
      %562 = vmatprep.subr.bf16.mxu0 0
      %563 = vmatpush1.bf16.msra.mxu0 0
      %564 = vmatprep.subr.bf16.mxu0 0
      %565 = vmatpush1.bf16.msra.mxu0 0
      %566 = vmatprep.subr.bf16.mxu0 0
      %567 = vmatpush1.bf16.msra.mxu0 0
      %568 = vmatprep.subr.bf16.mxu0 0
      %569 = vmatpush1.bf16.msra.mxu0 0
      %570 = vmatprep.subr.bf16.mxu0 0
      %571 = vmatpush1.bf16.msra.mxu0 0
      %572 = vmatprep.subr.bf16.mxu0 0
      %573 = vmatpush1.bf16.msra.mxu0 0
      %574 = vmatprep.subr.bf16.mxu0 0
      %575 = vmatpush1.bf16.msra.mxu0 0
      %576 = vmatprep.subr.bf16.mxu0 0
      %577 = vmatpush1.bf16.msra.mxu0 0
      %578 = vmatprep.subr.bf16.mxu0 0
      %579 = vmatpush1.bf16.msra.mxu0 0
      %580 = vmatprep.subr.bf16.mxu0 0
      %581 = vmatpush1.bf16.msra.mxu0 0
      %582 = vmatprep.subr.bf16.mxu0 0
      %583 = vmatpush1.bf16.msra.mxu0 0
      %584 = vmatprep.subr.bf16.mxu0 0
      %585 = vmatpush1.bf16.msra.mxu0 0
      %586 = vmatprep.mubr.bf16.mxu0 0
      %587 = vmatmul.mubr.bf16.gmra.mrb[0].mxu0 %v503
      %v588 = vpop.f32.mrb[0].mxu0
      %v589 = vadd.f32 0.0, %v588
      %v590 = vpop.f32.mrb[0].mxu0
      %v591 = vpop.f32.mrb[0].mxu0
      %v592 = vadd.f32 0.0, %v591
      %v593 = vpop.f32.mrb[0].mxu0
      %594 = vmatprep.mubr.bf16.mxu0 0
      %595 = vmatmul.mubr.bf16.gmra.mrb[0].mxu0 %v506
      %v596 = vpop.f32.mrb[0].mxu0
      %v597 = vadd.f32 0.0, %v596
      %v598 = vpop.f32.mrb[0].mxu0
      %v599 = vpop.f32.mrb[0].mxu0
      %v600 = vadd.f32 0.0, %v599
      %v601 = vpop.f32.mrb[0].mxu0
      %602 = vmatprep.mubr.bf16.mxu0 0
      %603 = vmatmul.mubr.bf16.gmra.mrb[0].mxu0 %v509
      %v604 = vpop.f32.mrb[0].mxu0
      %v605 = vadd.f32 0.0, %v604
      %v606 = vpop.f32.mrb[0].mxu0
      %v607 = vpop.f32.mrb[0].mxu0
      %v608 = vadd.f32 0.0, %v607
      %v609 = vpop.f32.mrb[0].mxu0
      %610 = vmatprep.mubr.bf16.mxu0 0
      %611 = vmatmul.mubr.bf16.gmra.mrb[0].mxu0 %v512
      %v612 = vpop.f32.mrb[0].mxu0
      %v613 = vadd.f32 0.0, %v612
      %v614 = vpop.f32.mrb[0].mxu0
      %v615 = vpop.f32.mrb[0].mxu0
      %v616 = vadd.f32 0.0, %v615
      %v617 = vpop.f32.mrb[0].mxu0
      %618 = vmatprep.mubr.bf16.mxu0 0
      %619 = vmatmul.mubr.bf16.gmra.mrb[0].mxu0 %v515
      %v620 = vpop.f32.mrb[0].mxu0
      %v621 = vadd.f32 0.0, %v620
      %v622 = vpop.f32.mrb[0].mxu0
      %v623 = vpop.f32.mrb[0].mxu0
      %v624 = vadd.f32 0.0, %v623
      %v625 = vpop.f32.mrb[0].mxu0
      %626 = vmatprep.mubr.bf16.mxu0 0
      %627 = vmatmul.mubr.bf16.gmra.mrb[0].mxu0 %v518
      %v628 = vpop.f32.mrb[0].mxu0
      %v629 = vadd.f32 0.0, %v628
      %v630 = vpop.f32.mrb[0].mxu0
      %v631 = vpop.f32.mrb[0].mxu0
      %v632 = vadd.f32 0.0, %v631
      %v633 = vpop.f32.mrb[0].mxu0
      %634 = vmatprep.mubr.bf16.mxu0 0
      %635 = vmatmul.mubr.bf16.gmra.mrb[0].mxu0 %v521
      %v636 = vpop.f32.mrb[0].mxu0
      %v637 = vadd.f32 0.0, %v636
      %v638 = vpop.f32.mrb[0].mxu0
      %v639 = vpop.f32.mrb[0].mxu0
      %v640 = vadd.f32 0.0, %v639
      %v641 = vpop.f32.mrb[0].mxu0
      %642 = vmatprep.mubr.bf16.mxu0 0
      %643 = vmatmul.mubr.bf16.gmra.mrb[0].mxu0 %v524
      %v644 = vpop.f32.mrb[0].mxu0
      %v645 = vadd.f32 0.0, %v644
      %v646 = vpop.f32.mrb[0].mxu0
      %v647 = vpop.f32.mrb[0].mxu0
      %v648 = vadd.f32 0.0, %v647
      %v649 = vpop.f32.mrb[0].mxu0
      %650 = vmatprep.mubr.bf16.mxu0 0
      %651 = vmatmul.mubr.bf16.gmra.mrb[0].mxu0 %v527
      %v652 = vpop.f32.mrb[0].mxu0
      %v653 = vadd.f32 0.0, %v652
      %v654 = vpop.f32.mrb[0].mxu0
      %v655 = vpop.f32.mrb[0].mxu0
      %v656 = vadd.f32 0.0, %v655
      %v657 = vpop.f32.mrb[0].mxu0
      %658 = vmatprep.mubr.bf16.mxu0 0
      %659 = vmatmul.mubr.bf16.gmra.mrb[0].mxu0 %v530
      %v660 = vpop.f32.mrb[0].mxu0
      %v661 = vadd.f32 0.0, %v660
      %v662 = vpop.f32.mrb[0].mxu0
      %v663 = vpop.f32.mrb[0].mxu0
      %v664 = vadd.f32 0.0, %v663
      %v665 = vpop.f32.mrb[0].mxu0
      %666 = vmatprep.mubr.bf16.mxu0 0
      %667 = vmatmul.mubr.bf16.gmra.mrb[0].mxu0 %v533
      %v668 = vpop.f32.mrb[0].mxu0
      %v669 = vadd.f32 0.0, %v668
      %v670 = vpop.f32.mrb[0].mxu0
      %v671 = vpop.f32.mrb[0].mxu0
      %v672 = vadd.f32 0.0, %v671
      %v673 = vpop.f32.mrb[0].mxu0
      %674 = vmatprep.mubr.bf16.mxu0 0
      %675 = vmatmul.mubr.bf16.gmra.mrb[0].mxu0 %v536
      %v676 = vpop.f32.mrb[0].mxu0
      %v677 = vadd.f32 0.0, %v676
      %v678 = vpop.f32.mrb[0].mxu0
      %v679 = vpop.f32.mrb[0].mxu0
      %v680 = vadd.f32 0.0, %v679
      %v681 = vpop.f32.mrb[0].mxu0
      %682 = vmatprep.mubr.bf16.mxu0 0
      %683 = vmatmul.mubr.bf16.gmra.mrb[0].mxu0 %v539
      %v684 = vpop.f32.mrb[0].mxu0
      %v685 = vadd.f32 0.0, %v684
      %v686 = vpop.f32.mrb[0].mxu0
      %v687 = vpop.f32.mrb[0].mxu0
      %v688 = vadd.f32 0.0, %v687
      %v689 = vpop.f32.mrb[0].mxu0
      %690 = vmatprep.mubr.bf16.mxu0 0
      %691 = vmatmul.mubr.bf16.gmra.mrb[0].mxu0 %v542
      %v692 = vpop.f32.mrb[0].mxu0
      %v693 = vadd.f32 0.0, %v692
      %v694 = vpop.f32.mrb[0].mxu0
      %v695 = vpop.f32.mrb[0].mxu0
      %v696 = vadd.f32 0.0, %v695
      %v697 = vpop.f32.mrb[0].mxu0
      %698 = vmatprep.mubr.bf16.mxu0 0
      %699 = vmatmul.mubr.bf16.gmra.mrb[0].mxu0 %v545
      %v700 = vpop.f32.mrb[0].mxu0
      %v701 = vadd.f32 0.0, %v700
      %v702 = vpop.f32.mrb[0].mxu0
      %v703 = vpop.f32.mrb[0].mxu0
      %v704 = vadd.f32 0.0, %v703
      %v705 = vpop.f32.mrb[0].mxu0
      %706 = vmatprep.mubr.bf16.mxu0 0
      %707 = vmatmul.mubr.bf16.gmra.mrb[0].mxu0 %v548
      %v708 = vpop.f32.mrb[0].mxu0
      %v709 = vadd.f32 0.0, %v708
      %v710 = vpop.f32.mrb[0].mxu0
      %v711 = vpop.f32.mrb[0].mxu0
      %v712 = vadd.f32 0.0, %v711
      %v713 = vpop.f32.mrb[0].mxu0
      %714 = vdwg.mxu0
      %v715 = vadd.f32 %v337, %v589
      %v716 = vadd.f32 %v338, %v592
      %v717 = vadd.f32 %v339, %v597
      %v718 = vadd.f32 %v340, %v600
      %v719 = vadd.f32 %v341, %v605
      %v720 = vadd.f32 %v342, %v608
      %v721 = vadd.f32 %v343, %v613
      %v722 = vadd.f32 %v344, %v616
      %v723 = vadd.f32 %v345, %v621
      %v724 = vadd.f32 %v346, %v624
      %v725 = vadd.f32 %v347, %v629
      %v726 = vadd.f32 %v348, %v632
      %v727 = vadd.f32 %v349, %v637
      %v728 = vadd.f32 %v350, %v640
      %v729 = vadd.f32 %v351, %v645
      %v730 = vadd.f32 %v352, %v648
      %v731 = vadd.f32 %v353, %v653
      %v732 = vadd.f32 %v354, %v656
      %v733 = vadd.f32 %v355, %v661
      %v734 = vadd.f32 %v356, %v664
      %v735 = vadd.f32 %v357, %v669
      %v736 = vadd.f32 %v358, %v672
      %v737 = vadd.f32 %v359, %v677
      %v738 = vadd.f32 %v360, %v680
      %v739 = vadd.f32 %v361, %v685
      %v740 = vadd.f32 %v362, %v688
      %v741 = vadd.f32 %v363, %v693
      %v742 = vadd.f32 %v364, %v696
      %v743 = vadd.f32 %v365, %v701
      %v744 = vadd.f32 %v366, %v704
      %v745 = vadd.f32 %v367, %v709
      %v746 = vadd.f32 %v368, %v712
      %747 = vst [vmem:[#allocation2] sm:$0xff] %v715
      %748 = vst [vmem:[#allocation2 + $0x8] sm:$0xff] %v716
      %749 = vst [vmem:[#allocation2 + $0x10] sm:$0xff] %v717
      %750 = vst [vmem:[#allocation2 + $0x18] sm:$0xff] %v718
      %751 = vst [vmem:[#allocation2 + $0x20] sm:$0xff] %v719
      %752 = vst [vmem:[#allocation2 + $0x28] sm:$0xff] %v720
      %753 = vst [vmem:[#allocation2 + $0x30] sm:$0xff] %v721
      %754 = vst [vmem:[#allocation2 + $0x38] sm:$0xff] %v722
      %755 = vst [vmem:[#allocation2 + $0x40] sm:$0xff] %v723
      %756 = vst [vmem:[#allocation2 + $0x48] sm:$0xff] %v724
      %757 = vst [vmem:[#allocation2 + $0x50] sm:$0xff] %v725
      %758 = vst [vmem:[#allocation2 + $0x58] sm:$0xff] %v726
      %759 = vst [vmem:[#allocation2 + $0x60] sm:$0xff] %v727
      %760 = vst [vmem:[#allocation2 + $0x68] sm:$0xff] %v728
      %761 = vst [vmem:[#allocation2 + $0x70] sm:$0xff] %v729
      %762 = vst [vmem:[#allocation2 + $0x78] sm:$0xff] %v730
      %763 = vst [vmem:[#allocation2 + $0x80] sm:$0xff] %v731
      %764 = vst [vmem:[#allocation2 + $0x88] sm:$0xff] %v732
      %765 = vst [vmem:[#allocation2 + $0x90] sm:$0xff] %v733
      %766 = vst [vmem:[#allocation2 + $0x98] sm:$0xff] %v734
      %767 = vst [vmem:[#allocation2 + $0xa0] sm:$0xff] %v735
      %768 = vst [vmem:[#allocation2 + $0xa8] sm:$0xff] %v736
      %769 = vst [vmem:[#allocation2 + $0xb0] sm:$0xff] %v737
      %770 = vst [vmem:[#allocation2 + $0xb8] sm:$0xff] %v738
      %771 = vst [vmem:[#allocation2 + $0xc0] sm:$0xff] %v739
      %772 = vst [vmem:[#allocation2 + $0xc8] sm:$0xff] %v740
      %773 = vst [vmem:[#allocation2 + $0xd0] sm:$0xff] %v741
      %774 = vst [vmem:[#allocation2 + $0xd8] sm:$0xff] %v742
      %775 = vst [vmem:[#allocation2 + $0xe0] sm:$0xff] %v743
      %776 = vst [vmem:[#allocation2 + $0xe8] sm:$0xff] %v744
      %777 = vst [vmem:[#allocation2 + $0xf0] sm:$0xff] %v745
      %778 = vst [vmem:[#allocation2 + $0xf8] sm:$0xff] %v746
      // Predicated region
      $region41: #{conv_bn_act_forward.1} parent=35 // pred_check
        %p779 = pneg %p301
      $region42: #{conv_bn_act_forward.1} parent=35 // pred_check_branch
        %781 = sbr.rel (%p779) target = $region44
      $region43: #{conv_bn_act_forward.1} parent=35 // pred_region
        %v782 = vld [vmem:[#allocation2] sm:$0xff]
        %v783 = vld [vmem:[#allocation2 + $0x8] sm:$0xff]
        %v784 = vld [vmem:[#allocation2 + $0x10] sm:$0xff]
        %v785 = vld [vmem:[#allocation2 + $0x18] sm:$0xff]
        %v786 = vld [vmem:[#allocation2 + $0x20] sm:$0xff]
        %v787 = vld [vmem:[#allocation2 + $0x28] sm:$0xff]
        %v788 = vld [vmem:[#allocation2 + $0x30] sm:$0xff]
        %v789 = vld [vmem:[#allocation2 + $0x38] sm:$0xff]
        %v790 = vld [vmem:[#allocation2 + $0x40] sm:$0xff]
        %v791 = vld [vmem:[#allocation2 + $0x48] sm:$0xff]
        %v792 = vld [vmem:[#allocation2 + $0x50] sm:$0xff]
        %v793 = vld [vmem:[#allocation2 + $0x58] sm:$0xff]
        %v794 = vld [vmem:[#allocation2 + $0x60] sm:$0xff]
        %v795 = vld [vmem:[#allocation2 + $0x68] sm:$0xff]
        %v796 = vld [vmem:[#allocation2 + $0x70] sm:$0xff]
        %v797 = vld [vmem:[#allocation2 + $0x78] sm:$0xff]
        %v798 = vld [vmem:[#allocation2 + $0x80] sm:$0xff]
        %v799 = vld [vmem:[#allocation2 + $0x88] sm:$0xff]
        %v800 = vld [vmem:[#allocation2 + $0x90] sm:$0xff]
        %v801 = vld [vmem:[#allocation2 + $0x98] sm:$0xff]
        %v802 = vld [vmem:[#allocation2 + $0xa0] sm:$0xff]
        %v803 = vld [vmem:[#allocation2 + $0xa8] sm:$0xff]
        %v804 = vld [vmem:[#allocation2 + $0xb0] sm:$0xff]
        %v805 = vld [vmem:[#allocation2 + $0xb8] sm:$0xff]
        %v806 = vld [vmem:[#allocation2 + $0xc0] sm:$0xff]
        %v807 = vld [vmem:[#allocation2 + $0xc8] sm:$0xff]
        %v808 = vld [vmem:[#allocation2 + $0xd0] sm:$0xff]
        %v809 = vld [vmem:[#allocation2 + $0xd8] sm:$0xff]
        %v810 = vld [vmem:[#allocation2 + $0xe0] sm:$0xff]
        %v811 = vld [vmem:[#allocation2 + $0xe8] sm:$0xff]
        %v812 = vld [vmem:[#allocation2 + $0xf0] sm:$0xff]
        %v813 = vld [vmem:[#allocation2 + $0xf8] sm:$0xff]
        %v814 = vld [vmem:[%s287] sm:$0x1]
        %v816 = vlaneseq
        %v817 = vshrl.u32 %v816, 7
        %v818 = vsub.s32 0, %v817
        %v819 = vrot.slane %v814, %v818
        %v821 = vmul.f32 %v782, %v819
        %v822 = vmul.f32 %v783, %v819
        %v823 = vmul.f32 %v784, %v819
        %v824 = vmul.f32 %v785, %v819
        %v825 = vmul.f32 %v786, %v819
        %v826 = vmul.f32 %v787, %v819
        %v827 = vmul.f32 %v788, %v819
        %v828 = vmul.f32 %v789, %v819
        %v829 = vmul.f32 %v790, %v819
        %v830 = vmul.f32 %v791, %v819
        %v831 = vmul.f32 %v792, %v819
        %v832 = vmul.f32 %v793, %v819
        %v833 = vmul.f32 %v794, %v819
        %v834 = vmul.f32 %v795, %v819
        %v835 = vmul.f32 %v796, %v819
        %v836 = vmul.f32 %v797, %v819
        %v837 = vmul.f32 %v798, %v819
        %v838 = vmul.f32 %v799, %v819
        %v839 = vmul.f32 %v800, %v819
        %v840 = vmul.f32 %v801, %v819
        %v841 = vmul.f32 %v802, %v819
        %v842 = vmul.f32 %v803, %v819
        %v843 = vmul.f32 %v804, %v819
        %v844 = vmul.f32 %v805, %v819
        %v845 = vmul.f32 %v806, %v819
        %v846 = vmul.f32 %v807, %v819
        %v847 = vmul.f32 %v808, %v819
        %v848 = vmul.f32 %v809, %v819
        %v849 = vmul.f32 %v810, %v819
        %v850 = vmul.f32 %v811, %v819
        %v851 = vmul.f32 %v812, %v819
        %v852 = vmul.f32 %v813, %v819
        %v853 = vld [vmem:[%s290] sm:$0x1]
        %v855 = vlaneseq
        %v856 = vshrl.u32 %v855, 7
        %v857 = vsub.s32 0, %v856
        %v858 = vrot.slane %v853, %v857
        %v860 = vadd.f32 %v821, %v858
        %v861 = vadd.f32 %v822, %v858
        %v862 = vadd.f32 %v823, %v858
        %v863 = vadd.f32 %v824, %v858
        %v864 = vadd.f32 %v825, %v858
        %v865 = vadd.f32 %v826, %v858
        %v866 = vadd.f32 %v827, %v858
        %v867 = vadd.f32 %v828, %v858
        %v868 = vadd.f32 %v829, %v858
        %v869 = vadd.f32 %v830, %v858
        %v870 = vadd.f32 %v831, %v858
        %v871 = vadd.f32 %v832, %v858
        %v872 = vadd.f32 %v833, %v858
        %v873 = vadd.f32 %v834, %v858
        %v874 = vadd.f32 %v835, %v858
        %v875 = vadd.f32 %v836, %v858
        %v876 = vadd.f32 %v837, %v858
        %v877 = vadd.f32 %v838, %v858
        %v878 = vadd.f32 %v839, %v858
        %v879 = vadd.f32 %v840, %v858
        %v880 = vadd.f32 %v841, %v858
        %v881 = vadd.f32 %v842, %v858
        %v882 = vadd.f32 %v843, %v858
        %v883 = vadd.f32 %v844, %v858
        %v884 = vadd.f32 %v845, %v858
        %v885 = vadd.f32 %v846, %v858
        %v886 = vadd.f32 %v847, %v858
        %v887 = vadd.f32 %v848, %v858
        %v888 = vadd.f32 %v849, %v858
        %v889 = vadd.f32 %v850, %v858
        %v890 = vadd.f32 %v851, %v858
        %v891 = vadd.f32 %v852, %v858
        %v892 = vmax.f32 %v860, 0.0
        %v893 = vmax.f32 %v861, 0.0
        %v894 = vmax.f32 %v862, 0.0
        %v895 = vmax.f32 %v863, 0.0
        %v896 = vmax.f32 %v864, 0.0
        %v897 = vmax.f32 %v865, 0.0
        %v898 = vmax.f32 %v866, 0.0
        %v899 = vmax.f32 %v867, 0.0
        %v900 = vmax.f32 %v868, 0.0
        %v901 = vmax.f32 %v869, 0.0
        %v902 = vmax.f32 %v870, 0.0
        %v903 = vmax.f32 %v871, 0.0
        %v904 = vmax.f32 %v872, 0.0
        %v905 = vmax.f32 %v873, 0.0
        %v906 = vmax.f32 %v874, 0.0
        %v907 = vmax.f32 %v875, 0.0
        %v908 = vmax.f32 %v876, 0.0
        %v909 = vmax.f32 %v877, 0.0
        %v910 = vmax.f32 %v878, 0.0
        %v911 = vmax.f32 %v879, 0.0
        %v912 = vmax.f32 %v880, 0.0
        %v913 = vmax.f32 %v881, 0.0
        %v914 = vmax.f32 %v882, 0.0
        %v915 = vmax.f32 %v883, 0.0
        %v916 = vmax.f32 %v884, 0.0
        %v917 = vmax.f32 %v885, 0.0
        %v918 = vmax.f32 %v886, 0.0
        %v919 = vmax.f32 %v887, 0.0
        %v920 = vmax.f32 %v888, 0.0
        %v921 = vmax.f32 %v889, 0.0
        %v922 = vmax.f32 %v890, 0.0
        %v923 = vmax.f32 %v891, 0.0
        %924 = vst [vmem:[%s298] sm:$0xff] %v892
        %925 = vst [vmem:[%s298 + $0x8] sm:$0xff] %v893
        %926 = vst [vmem:[%s298 + $0x10] sm:$0xff] %v894
        %927 = vst [vmem:[%s298 + $0x18] sm:$0xff] %v895
        %928 = vst [vmem:[%s298 + $0x20] sm:$0xff] %v896
        %929 = vst [vmem:[%s298 + $0x28] sm:$0xff] %v897
        %930 = vst [vmem:[%s298 + $0x30] sm:$0xff] %v898
        %931 = vst [vmem:[%s298 + $0x38] sm:$0xff] %v899
        %932 = vst [vmem:[%s298 + $0x40] sm:$0xff] %v900
        %933 = vst [vmem:[%s298 + $0x48] sm:$0xff] %v901
        %934 = vst [vmem:[%s298 + $0x50] sm:$0xff] %v902
        %935 = vst [vmem:[%s298 + $0x58] sm:$0xff] %v903
        %936 = vst [vmem:[%s298 + $0x60] sm:$0xff] %v904
        %937 = vst [vmem:[%s298 + $0x68] sm:$0xff] %v905
        %938 = vst [vmem:[%s298 + $0x70] sm:$0xff] %v906
        %939 = vst [vmem:[%s298 + $0x78] sm:$0xff] %v907
        %940 = vst [vmem:[%s298 + $0x80] sm:$0xff] %v908
        %941 = vst [vmem:[%s298 + $0x88] sm:$0xff] %v909
        %942 = vst [vmem:[%s298 + $0x90] sm:$0xff] %v910
        %943 = vst [vmem:[%s298 + $0x98] sm:$0xff] %v911
        %944 = vst [vmem:[%s298 + $0xa0] sm:$0xff] %v912
        %945 = vst [vmem:[%s298 + $0xa8] sm:$0xff] %v913
        %946 = vst [vmem:[%s298 + $0xb0] sm:$0xff] %v914
        %947 = vst [vmem:[%s298 + $0xb8] sm:$0xff] %v915
        %948 = vst [vmem:[%s298 + $0xc0] sm:$0xff] %v916
        %949 = vst [vmem:[%s298 + $0xc8] sm:$0xff] %v917
        %950 = vst [vmem:[%s298 + $0xd0] sm:$0xff] %v918
        %951 = vst [vmem:[%s298 + $0xd8] sm:$0xff] %v919
        %952 = vst [vmem:[%s298 + $0xe0] sm:$0xff] %v920
        %953 = vst [vmem:[%s298 + $0xe8] sm:$0xff] %v921
        %954 = vst [vmem:[%s298 + $0xf0] sm:$0xff] %v922
        %955 = vst [vmem:[%s298 + $0xf8] sm:$0xff] %v923
      $region44: #{conv_bn_act_forward.1} parent=35 // pred_fallthru
        _
      %s956 = smul.u32 32, %s20
      %p957 = scmp.lt.s32.totalorder %s956, 63
      %s958 = scalar_select %p957, %s956, 63
      %p959 = scmp.lt.s32.totalorder %s21, 0
      %s960 = scalar_select %p959, %s21, 0
      %s961 = sadd.s32 %s960, %s958
      %s962 = smul.addr %s961, 8
      %s963 = scalar_lea.vmem %s4, %s962
      // Predicated region
      $region45: #{conv_bn_act_forward.1} parent=35 // pred_check
        %p964 = pneg %p162
      $region46: #{conv_bn_act_forward.1} parent=35 // pred_check_branch
        %966 = sbr.rel (%p964) target = $region48
      $region47: #{conv_bn_act_forward.1} parent=35 // pred_region
        %s967 = smul.u32 32, %s20
      $region48: #{conv_bn_act_forward.1} parent=35 // pred_fallthru
        _
    $region36: #{conv_bn_act_forward.1} parent=5 // pred_fallthru
      _
    %p968 = scmp.le.s32.totalorder 2, %s10
    // Predicated region
    $region49: #{conv_bn_act_forward.1} parent=5 // pred_check
      %p969 = pneg %p968
    $region50: #{conv_bn_act_forward.1} parent=5 // pred_check_branch
      %971 = sbr.rel (%p969) target = $region52
    $region51: #{conv_bn_act_forward.1} parent=5 // pred_region
      %s972 = ssub.s32 %s10, 2
      // Predicated region
      $region53: #{conv_bn_act_forward.1} parent=51 // pred_check
        %p973 = pneg %p168
      $region54: #{conv_bn_act_forward.1} parent=51 // pred_check_branch
        %975 = sbr.rel (%p973) target = $region56
      $region55: #{conv_bn_act_forward.1} parent=51 // pred_region
        %s976 = smul.u32 32, %s23
        %p977 = scmp.lt.s32.totalorder %s976, 63
        %s978 = scalar_select %p977, %s976, 63
        %p979 = scmp.lt.s32.totalorder %s24, 0
        %s980 = scalar_select %p979, %s24, 0
        %s981 = sadd.s32 %s980, %s978
        %s982 = smul.addr %s981, 8
        %s983 = scalar_lea.vmem %s4, %s982
      $region56: #{conv_bn_act_forward.1} parent=51 // pred_fallthru
        _
    $region52: #{conv_bn_act_forward.1} parent=5 // pred_fallthru
      _
  $region6: #{conv_bn_act_forward.1} parent=0 // loop_footer
    %s14 = sadd.s32 1, %s10
  $region7: #{conv_bn_act_forward.1} parent=0 // loop_footer_branch
    %9 = sbr.rel target = $region3
  $region8: #{conv_bn_act_forward.1} parent=0 // loop_exit
    _

</llo_original>
